<compile_context>
chip_gen: v7x
topology: tpu7x:2x2x1
jax: 0.10.0
libtpu: 0.0.40
codegen_flags: <defaults>
</compile_context>

<pallas_src>
import functools

import jax
import jax.numpy as jnp
from jax import lax
from jax.experimental import pallas as pl
from jax.experimental.pallas import tpu as pltpu


_MAX_ROW_TILE = 2048          # keeps worst-case VMEM comfortably under the scoped limit
_SQRT_2 = 1.4142135623730951
_SQRT_2_OVER_PI = 0.7978845608028654


def _gelu_exact(x):
    # PyTorch nn.GELU() default: exact erf formulation (VPU polynomial).
    return 0.5 * x * (1.0 + lax.erf(x * (1.0 / _SQRT_2)))


def _gelu_tanh(x):
    # PyTorch nn.GELU(approximate='tanh'); tanh lowers to the EUP slot.
    return 0.5 * x * (1.0 + jnp.tanh(_SQRT_2_OVER_PI * (x + 0.044715 * x * x * x)))


def _pos_enc_kernel(x_ref, w1_ref, b1_ref, w2_ref, b2_ref, g_ref, beta_ref,
                    o_ref, *, use_layernorm: bool, approx_gelu: bool,
                    bf16_matmul: bool, eps: float):
    # x_ref:  (tm, in_dim)       w1_ref: (in_dim, hidden)   b1_ref: (1, hidden)
    # w2_ref: (hidden, embed)    b2_ref: (1, embed)
    # g_ref / beta_ref: (1, embed) LayerNorm affine params (ignored if unused)
    x = x_ref[...]
    if bf16_matmul:
        x = x.astype(jnp.bfloat16)        # w1_ref already bf16 (cast in wrapper)
    h = jnp.dot(x, w1_ref[...], preferred_element_type=jnp.float32) + b1_ref[...]
    h = _gelu_tanh(h) if approx_gelu else _gelu_exact(h)
    if bf16_matmul:
        h = h.astype(jnp.bfloat16)        # w2_ref already bf16 (cast in wrapper)
    out = jnp.dot(h, w2_ref[...], preferred_element_type=jnp.float32) + b2_ref[...]

    if use_layernorm:
        d = out.shape[-1]
        inv_d = 1.0 / d
        # One-pass moments: mean and E[x^2] - mean^2 (two XLU reductions total).
        s1 = jnp.sum(out, axis=-1, keepdims=True)
        s2 = jnp.sum(out * out, axis=-1, keepdims=True)
        mean = s1 * inv_d
        var = jnp.maximum(s2 * inv_d - mean * mean, 0.0)
        out = (out - mean) * lax.rsqrt(var + eps)
        out = out * g_ref[...] + beta_ref[...]

    o_ref[...] = out.astype(o_ref.dtype)


def _detect_core_parallel() -> bool:
    """Enable core-parallel grid sharding only on dual-TensorCore chips (v7x)."""
    try:
        kind = jax.devices()[0].device_kind.lower()
    except Exception:  # pragma: no cover - defensive
        return False
    return ("v7" in kind) or ("7x" in kind)


def _choose_row_tile(M: int, row_tile: int, num_cores: int) -> int:
    """Pick a row tile: big (amortize ~0.35 us/step), multiple of 8 sublanes,
    capped for VMEM, keeping >=2 grid steps per core (>=4 total on v7x) and a
    step count balanced across cores."""
    num_cores = max(1, num_cores)
    min_steps = 2 * num_cores
    tm = min(int(row_tile), _MAX_ROW_TILE)
    if M > 8 * min_steps:
        tm = min(tm, pl.cdiv(M, min_steps))
    tm = min(tm, M) if M >= 8 else 8
    tm = max(8, (tm // 8) * 8)
    if num_cores > 1 and M > 8 * num_cores:
        # Round the total step count up to a multiple of the core count so the
        # cores stay balanced (avoid e.g. a 2-vs-1 split on a 3-step grid).
        steps = pl.cdiv(M, tm)
        if steps % num_cores:
            steps = pl.cdiv(steps, num_cores) * num_cores
            tm = max(8, ((pl.cdiv(M, steps) + 7) // 8) * 8)
    return tm


def learned_positional_encoder(pos, params, *, use_layernorm=False, eps=1e-5,
                               row_tile=1024, approx_gelu=False,
                               bf16_matmul=False, out_dtype=None,
                               core_parallel=None):
    """pos: (B, N, in_dim) -> (B, N, embed_dim).

    bf16_matmul:  cast matmul operands to bf16 (f32 accumulate) — fastest path,
                  slightly different numerics from the f32 PyTorch module.
    out_dtype:    output dtype (default: pos.dtype); bf16 halves output HBM traffic.
    core_parallel: shard the row-grid axis across TensorCores (auto: v7x only).
    """
    B, N, in_dim = pos.shape
    w1, b1, w2, b2, gamma, beta = params
    hidden = w1.shape[1]
    embed_dim = w2.shape[1]
    out_dtype = pos.dtype if out_dtype is None else out_dtype

    if core_parallel is None:
        core_parallel = _detect_core_parallel()
    num_cores = 2 if core_parallel else 1

    M = B * N
    x = pos.reshape(M, in_dim)

    tm = _choose_row_tile(M, row_tile, num_cores)
    grid = (pl.cdiv(M, tm),)   # ragged last block handled by Pallas (no pad/slice)

    if bf16_matmul:
        # Weights are resident (constant index_map): cast once, halve their DMA.
        w1 = w1.astype(jnp.bfloat16)
        w2 = w2.astype(jnp.bfloat16)

    b1_2d = b1.reshape(1, hidden).astype(jnp.float32)
    b2_2d = b2.reshape(1, embed_dim).astype(jnp.float32)
    g_2d = gamma.reshape(1, embed_dim).astype(jnp.float32)
    beta_2d = beta.reshape(1, embed_dim).astype(jnp.float32)

    kernel = functools.partial(_pos_enc_kernel,
                               use_layernorm=use_layernorm,
                               approx_gelu=approx_gelu,
                               bf16_matmul=bf16_matmul,
                               eps=eps)

    row_semantics = pltpu.CORE_PARALLEL if core_parallel else "parallel"

    out = pl.pallas_call(
        kernel,
        out_shape=jax.ShapeDtypeStruct((M, embed_dim), out_dtype),
        grid_spec=pltpu.PrefetchScalarGridSpec(
            num_scalar_prefetch=0,
            grid=grid,
            in_specs=[
                pl.BlockSpec((tm, in_dim), lambda i: (i, 0)),        # x rows
                pl.BlockSpec((in_dim, hidden), lambda i: (0, 0)),    # w1 (resident)
                pl.BlockSpec((1, hidden), lambda i: (0, 0)),         # b1
                pl.BlockSpec((hidden, embed_dim), lambda i: (0, 0)), # w2 (resident)
                pl.BlockSpec((1, embed_dim), lambda i: (0, 0)),      # b2
                pl.BlockSpec((1, embed_dim), lambda i: (0, 0)),      # ln gamma
                pl.BlockSpec((1, embed_dim), lambda i: (0, 0)),      # ln beta
            ],
            out_specs=pl.BlockSpec((tm, embed_dim), lambda i: (i, 0)),
        ),
        compiler_params=pltpu.CompilerParams(
            dimension_semantics=(row_semantics,),
            vmem_limit_bytes=32 << 20),
    )(x, w1, b1_2d, w2, b2_2d, g_2d, beta_2d)

    return out.reshape(B, N, embed_dim)


def init_params(key, in_dim, hidden, embed_dim, dtype=jnp.float32):
    """Deterministic synthetic init (shapes match nn.Linear / nn.LayerNorm)."""
    k1, k2, k3, k4 = jax.random.split(key, 4)
    # Stored as (in, out) so the kernel computes x @ W + b.
    w1 = jax.random.normal(k1, (in_dim, hidden), dtype) * 0.1
    b1 = jax.random.normal(k2, (hidden,), dtype) * 0.01
    w2 = jax.random.normal(k3, (hidden, embed_dim), dtype) * 0.1
    b2 = jax.random.normal(k4, (embed_dim,), dtype) * 0.01
    gamma = jnp.ones((embed_dim,), dtype)   # LayerNorm weight
    beta = jnp.zeros((embed_dim,), dtype)   # LayerNorm bias
    return (w1, b1, w2, b2, gamma, beta)


def _reference(pos, params, use_layernorm, eps=1e-5, approx_gelu=False):
    w1, b1, w2, b2, gamma, beta = params
    pre = pos @ w1 + b1
    h = _gelu_tanh(pre) if approx_gelu else _gelu_exact(pre)
    out = h @ w2 + b2
    if use_layernorm:
        mean = jnp.mean(out, axis=-1, keepdims=True)
        var = jnp.mean(jnp.square(out - mean), axis=-1, keepdims=True)
        out = (out - mean) * lax.rsqrt(var + eps) * gamma + beta
    return out


if __name__ == "__main__":
    in_dim, hidden, embed_dim = 3, 128, 128
    key = jax.random.PRNGKey(0)
    kp, kx, ky = jax.random.split(key, 3)
    params = init_params(kp, in_dim, hidden, embed_dim)

    # Small module-consistent shape: batch=2, N=8 points, 3D coords.
    B, N = 2, 8
    pos = jax.random.normal(kx, (B, N, in_dim), jnp.float32)

    # 1) Default path (f32 MXU, no LayerNorm, exact erf GELU — module default).
    out = jax.block_until_ready(learned_positional_encoder(pos, params))
    ref = _reference(pos, params, use_layernorm=False)
    assert out.shape == (B, N, embed_dim)
    assert jnp.allclose(out, ref, atol=1e-4, rtol=1e-4)

    # 2) LayerNorm path (one-pass moments in-kernel).
    out_ln = jax.block_until_ready(
        learned_positional_encoder(pos, params, use_layernorm=True))
    ref_ln = _reference(pos, params, use_layernorm=True)
    assert jnp.allclose(out_ln, ref_ln, atol=1e-4, rtol=1e-4)

    # 3) bf16 MXU operands + bf16 output (fast path; looser tolerance vs f32 ref).
    out_bf16 = jax.block_until_ready(
        learned_positional_encoder(pos, params, bf16_matmul=True,
                                   out_dtype=jnp.bfloat16))
    assert out_bf16.dtype == jnp.bfloat16
    assert jnp.allclose(out_bf16.astype(jnp.float32), ref, atol=5e-2, rtol=5e-2)

    # 4) EUP tanh-approx GELU path (opt-in; compared against tanh reference).
    out_tanh = jax.block_until_ready(
        learned_positional_encoder(pos, params, approx_gelu=True))
    ref_tanh = _reference(pos, params, use_layernorm=False, approx_gelu=True)
    assert jnp.allclose(out_tanh, ref_tanh, atol=1e-4, rtol=1e-4)

    # 5) Non-tile-aligned M exercises the ragged last block (no pad / no slice).
    B2, N2 = 3, 37   # M = 111, not a multiple of the chosen row tile
    pos2 = jax.random.normal(ky, (B2, N2, in_dim), jnp.float32)
    out2 = jax.block_until_ready(
        learned_positional_encoder(pos2, params, use_layernorm=True))
    ref2 = _reference(pos2, params, use_layernorm=True)
    assert out2.shape == (B2, N2, embed_dim)
    assert jnp.allclose(out2, ref2, atol=1e-4, rtol=1e-4)

    print("KERNEL_OK")
</pallas_src>

<mosaic_0001>
module attributes {stable_mosaic.version = 11 : i64} {
  func.func @_pos_enc_kernel(%arg0: i32, %arg1: memref<16x3xf32, #tpu.memory_space<vmem>>, %arg2: memref<3x128xf32, #tpu.memory_space<vmem>>, %arg3: memref<1x128xf32, #tpu.memory_space<vmem>>, %arg4: memref<128x128xf32, #tpu.memory_space<vmem>>, %arg5: memref<1x128xf32, #tpu.memory_space<vmem>>, %arg6: memref<1x128xf32, #tpu.memory_space<vmem>>, %arg7: memref<1x128xf32, #tpu.memory_space<vmem>>, %arg8: memref<16x128xf32, #tpu.memory_space<vmem>>) attributes {dimension_semantics = [#tpu.dimension_semantics<parallel>], iteration_bounds = array<i64: 1>, scalar_prefetch = 0 : i64, scratch_operands = 0 : i64, tpu.core_type = #tpu.core_type<tc>, window_params = [{transform_indices = @transform_0, window_bounds = array<i64: 16, 3>}, {pipeline_mode = #tpu.pipeline_mode<synchronous>, transform_indices = @transform_1, window_bounds = array<i64: 3, 128>}, {pipeline_mode = #tpu.pipeline_mode<synchronous>, transform_indices = @transform_2, window_bounds = array<i64: 1, 128>}, {pipeline_mode = #tpu.pipeline_mode<synchronous>, transform_indices = @transform_3, window_bounds = array<i64: 128, 128>}, {pipeline_mode = #tpu.pipeline_mode<synchronous>, transform_indices = @transform_4, window_bounds = array<i64: 1, 128>}, {pipeline_mode = #tpu.pipeline_mode<synchronous>, transform_indices = @transform_5, window_bounds = array<i64: 1, 128>}, {pipeline_mode = #tpu.pipeline_mode<synchronous>, transform_indices = @transform_6, window_bounds = array<i64: 1, 128>}, {transform_indices = @transform_7, window_bounds = array<i64: 16, 128>}]} {
    %c0 = arith.constant 0 : index
    %c0_0 = arith.constant 0 : index
    %0 = vector.load %arg1[%c0, %c0_0] : memref<16x3xf32, #tpu.memory_space<vmem>>, vector<16x3xf32>
    %c0_1 = arith.constant 0 : index
    %c0_2 = arith.constant 0 : index
    %1 = vector.load %arg2[%c0_1, %c0_2] : memref<3x128xf32, #tpu.memory_space<vmem>>, vector<3x128xf32>
    %cst = arith.constant dense<0.000000e+00> : vector<16x128xf32>
    %2 = tpu.matmul %0, %1, %cst {dimension_numbers = #tpu.dot_dimension_numbers<[1], [0], [0], [1], [0, 0, 1, 1], [], []>} : vector<16x3xf32>, vector<3x128xf32>, vector<16x128xf32> -> vector<16x128xf32>
    %c0_3 = arith.constant 0 : index
    %c0_4 = arith.constant 0 : index
    %3 = vector.load %arg3[%c0_3, %c0_4] : memref<1x128xf32, #tpu.memory_space<vmem>>, vector<1x128xf32>
    %4 = vector.broadcast %3 : vector<1x128xf32> to vector<16x128xf32>
    %5 = arith.addf %2, %4 : vector<16x128xf32>
    %cst_5 = arith.constant 5.000000e-01 : f32
    %6 = vector.broadcast %cst_5 : f32 to vector<16x128xf32>
    %7 = arith.mulf %6, %5 : vector<16x128xf32>
    %cst_6 = arith.constant 0.707106769 : f32
    %8 = vector.broadcast %cst_6 : f32 to vector<16x128xf32>
    %9 = arith.mulf %5, %8 : vector<16x128xf32>
    %10 = math.erf %9 : vector<16x128xf32>
    %cst_7 = arith.constant 1.000000e+00 : f32
    %11 = vector.broadcast %cst_7 : f32 to vector<16x128xf32>
    %12 = arith.addf %11, %10 : vector<16x128xf32>
    %13 = arith.mulf %7, %12 : vector<16x128xf32>
    %c0_8 = arith.constant 0 : index
    %c0_9 = arith.constant 0 : index
    %14 = vector.load %arg4[%c0_8, %c0_9] : memref<128x128xf32, #tpu.memory_space<vmem>>, vector<128x128xf32>
    %cst_10 = arith.constant dense<0.000000e+00> : vector<16x128xf32>
    %15 = tpu.matmul %13, %14, %cst_10 {dimension_numbers = #tpu.dot_dimension_numbers<[1], [0], [0], [1], [0, 0, 1, 1], [], []>} : vector<16x128xf32>, vector<128x128xf32>, vector<16x128xf32> -> vector<16x128xf32>
    %c0_11 = arith.constant 0 : index
    %c0_12 = arith.constant 0 : index
    %16 = vector.load %arg5[%c0_11, %c0_12] : memref<1x128xf32, #tpu.memory_space<vmem>>, vector<1x128xf32>
    %17 = vector.broadcast %16 : vector<1x128xf32> to vector<16x128xf32>
    %18 = arith.addf %15, %17 : vector<16x128xf32>
    %c0_13 = arith.constant 0 : index
    %c0_14 = arith.constant 0 : index
    %19 = vector.load %arg8[%c0_13, %c0_14] : memref<16x128xf32, #tpu.memory_space<vmem>>, vector<16x128xf32>
    tpu.vector_store %arg8[%c0_13, %c0_14], %18 {strides = array<i32>} : memref<16x128xf32, #tpu.memory_space<vmem>>, vector<16x128xf32>,
    return
  }
  func.func @transform_0(%arg0: i32) -> (i32, i32) {
    %c0_i32 = arith.constant 0 : i32
    %c0_i32_0 = arith.constant 0 : i32
    return %arg0, %c0_i32 : i32, i32
  }
  func.func @transform_1(%arg0: i32) -> (i32, i32) {
    %c0_i32 = arith.constant 0 : i32
    %c0_i32_0 = arith.constant 0 : i32
    %c0_i32_1 = arith.constant 0 : i32
    return %c0_i32, %c0_i32_0 : i32, i32
  }
  func.func @transform_2(%arg0: i32) -> (i32, i32) {
    %c0_i32 = arith.constant 0 : i32
    %c0_i32_0 = arith.constant 0 : i32
    %c0_i32_1 = arith.constant 0 : i32
    return %c0_i32, %c0_i32_0 : i32, i32
  }
  func.func @transform_3(%arg0: i32) -> (i32, i32) {
    %c0_i32 = arith.constant 0 : i32
    %c0_i32_0 = arith.constant 0 : i32
    %c0_i32_1 = arith.constant 0 : i32
    return %c0_i32, %c0_i32_0 : i32, i32
  }
  func.func @transform_4(%arg0: i32) -> (i32, i32) {
    %c0_i32 = arith.constant 0 : i32
    %c0_i32_0 = arith.constant 0 : i32
    %c0_i32_1 = arith.constant 0 : i32
    return %c0_i32, %c0_i32_0 : i32, i32
  }
  func.func @transform_5(%arg0: i32) -> (i32, i32) {
    %c0_i32 = arith.constant 0 : i32
    %c0_i32_0 = arith.constant 0 : i32
    %c0_i32_1 = arith.constant 0 : i32
    return %c0_i32, %c0_i32_0 : i32, i32
  }
  func.func @transform_6(%arg0: i32) -> (i32, i32) {
    %c0_i32 = arith.constant 0 : i32
    %c0_i32_0 = arith.constant 0 : i32
    %c0_i32_1 = arith.constant 0 : i32
    return %c0_i32, %c0_i32_0 : i32, i32
  }
  func.func @transform_7(%arg0: i32) -> (i32, i32) {
    %c0_i32 = arith.constant 0 : i32
    %c0_i32_0 = arith.constant 0 : i32
    return %arg0, %c0_i32 : i32, i32
  }
}

</mosaic_0001>

<llo_original>
// kernel: tpu_custom_call.1
$region0: #{tpu_custom_call.1}
  #allocation0 [shape = 'u32[]', space=smem, size = 0x4, offset = 0x4, fixed_abs, tag = 'smem constant byte address 0x4 - core index']
  #allocation1 [shape = 'u32[144,128]{1,0:T(1,128)}', space=vmem, size = 0x12000, scoped, tag = 'internal scratch']
  %s0 = inlined_call_operand.vmem [shape: f32[16,3], index: 0, kind: input, shape index: {}]
  %s1 = inlined_call_operand.vmem [shape: f32[3,128], index: 1, kind: input, shape index: {}]
  %s2 = inlined_call_operand.vmem [shape: f32[1,128], index: 2, kind: input, shape index: {}]
  %s3 = inlined_call_operand.hbm [shape: f32[128,128], index: 3, kind: input, shape index: {}]
  %s4 = inlined_call_operand.vmem [shape: f32[1,128], index: 4, kind: input, shape index: {}]
  %s5 = inlined_call_operand.vmem [shape: f32[1,128], index: 5, kind: input, shape index: {}]
  %s6 = inlined_call_operand.vmem [shape: f32[1,128], index: 6, kind: input, shape index: {}]
  %s7 = inlined_call_operand.hbm [shape: f32[16,128], index: 7, kind: output, shape index: {}]
  %s8 = sld [smem:[#allocation0]]
  $region42: #{tpu_custom_call.1} parent=0
    _
  %s10 = ssub.s32 1, %s8
  %s11 = scalar_select 0, %s10, %s8
  $region1: #{tpu_custom_call.1} parent=0
    #allocation2 [shape = 'u8[65536]{0}', space=vmem, size = 0x10000, scoped, tag = 'input window, operand 3, single buffered']
    #allocation3 [shape = 's32[1]{0}', space=sflag, size = 0x4, scoped, tag = 'scoped memory for tpu_custom_call.1']
    #allocation4 [shape = 's32[1]{0}', space=sflag, size = 0x4, scoped, tag = 'scoped memory for tpu_custom_call.1']
    #allocation5 [shape = 'u8[8192]{0}', space=vmem, size = 0x2000, scoped, tag = 'output window, operand 0, single buffered']
    %12 = vsyncpa [#allocation3], 0
    %13 = vsyncpa [#allocation4], 0
    // Predicated region
    $region2: #{tpu_custom_call.1} parent=1 // pred_check
      _
    $region3: #{tpu_custom_call.1} parent=1 // pred_check_branch
      %15 = sbr.rel (0) target = $region5
    $region4: #{tpu_custom_call.1} parent=1 // pred_region
      _
    $region5: #{tpu_custom_call.1} parent=1 // pred_fallthru
      _
    // Predicated region
    $region6: #{tpu_custom_call.1} parent=1 // pred_check
      _
    $region7: #{tpu_custom_call.1} parent=1 // pred_check_branch
      %17 = sbr.rel (0) target = $region9
    $region8: #{tpu_custom_call.1} parent=1 // pred_region
      _
    $region9: #{tpu_custom_call.1} parent=1 // pred_fallthru
      _
    // Predicated region
    $region10: #{tpu_custom_call.1} parent=1 // pred_check
      _
    $region11: #{tpu_custom_call.1} parent=1 // pred_check_branch
      %19 = sbr.rel (0) target = $region13
    $region12: #{tpu_custom_call.1} parent=1 // pred_region
      _
    $region13: #{tpu_custom_call.1} parent=1 // pred_fallthru
      _
    // Predicated region
    $region14: #{tpu_custom_call.1} parent=1 // pred_check
      _
    $region15: #{tpu_custom_call.1} parent=1 // pred_check_branch
      %21 = sbr.rel (0) target = $region17
    $region16: #{tpu_custom_call.1} parent=1 // pred_region
      %s23 = ssub.s32 2048, 2048
      %24 = vsyncadd [#allocation3], %s23
      %s25 = sshll.u32 [#allocation2], 4
      %s26 = int_to_ptr.vmem [resolvable:$true] %s25
      %31 = dma.hbm_to_vmem [thread:$0]  %s3, 2048, %s26, [#allocation3], 128, 128, 8
    $region17: #{tpu_custom_call.1} parent=1 // pred_fallthru
      _
    // Predicated region
    $region18: #{tpu_custom_call.1} parent=1 // pred_check
      _
    $region19: #{tpu_custom_call.1} parent=1 // pred_check_branch
      %33 = sbr.rel (0) target = $region21
    $region20: #{tpu_custom_call.1} parent=1 // pred_region
      _
    $region21: #{tpu_custom_call.1} parent=1 // pred_fallthru
      _
    // Predicated region
    $region22: #{tpu_custom_call.1} parent=1 // pred_check
      _
    $region23: #{tpu_custom_call.1} parent=1 // pred_check_branch
      %35 = sbr.rel (0) target = $region25
    $region24: #{tpu_custom_call.1} parent=1 // pred_region
      _
    $region25: #{tpu_custom_call.1} parent=1 // pred_fallthru
      _
    // Predicated region
    $region26: #{tpu_custom_call.1} parent=1 // pred_check
      _
    $region27: #{tpu_custom_call.1} parent=1 // pred_check_branch
      %37 = sbr.rel (0) target = $region29
    $region28: #{tpu_custom_call.1} parent=1 // pred_region
      _
    $region29: #{tpu_custom_call.1} parent=1 // pred_fallthru
      _
    // Predicated region
    $region30: #{tpu_custom_call.1} parent=1 // pred_check
      _
    $region31: #{tpu_custom_call.1} parent=1 // pred_check_branch
      %39 = sbr.rel (0) target = $region33
    $region32: #{tpu_custom_call.1} parent=1 // pred_region
      %40 = dma.done [#allocation3], 2048
    $region33: #{tpu_custom_call.1} parent=1 // pred_fallthru
      _
    %v41 = vld [vmem:[%s0] sm:$0xff]
    %v42 = vld [vmem:[%s0 + $0x8] sm:$0xff]
    %v43 = vld [vmem:[%s1] sm:$0x7]
    %v44 = vld [vmem:[%s2] sm:$0x1]
    %v46 = vlaneseq
    %v47 = vshrl.u32 %v46, 7
    %v48 = vsub.s32 0, %v47
    %v49 = vrot.slane %v44, %v48
    %vm51 = vcmask 23552
    %v53 = vsel %vm51, %v41, 0
    %v56 = vsel %vm51, %v42, 0
    %vm58 = vcmask 1042432
    %v60 = vsel %vm58, %v43, 0
    %62 = vmatprep.subr.mxu0 0.0
    %63 = vmatpush1.msra.mxu0 %v60
    %64 = vmatprep.subr.mxu0 0.0
    %65 = vmatpush1.msra.mxu0 0.0
    %66 = vmatprep.subr.mxu0 0.0
    %67 = vmatpush1.msra.mxu0 0.0
    %68 = vmatprep.subr.mxu0 0.0
    %69 = vmatpush1.msra.mxu0 0.0
    %70 = vmatprep.subr.mxu0 0.0
    %71 = vmatpush1.msra.mxu0 0.0
    %72 = vmatprep.subr.mxu0 0.0
    %73 = vmatpush1.msra.mxu0 0.0
    %74 = vmatprep.subr.mxu0 0.0
    %75 = vmatpush1.msra.mxu0 0.0
    %76 = vmatprep.subr.mxu0 0.0
    %77 = vmatpush1.msra.mxu0 0.0
    %78 = vmatprep.subr.mxu0 0.0
    %79 = vmatpush1.msra.mxu0 0.0
    %80 = vmatprep.subr.mxu0 0.0
    %81 = vmatpush1.msra.mxu0 0.0
    %82 = vmatprep.subr.mxu0 0.0
    %83 = vmatpush1.msra.mxu0 0.0
    %84 = vmatprep.subr.mxu0 0.0
    %85 = vmatpush1.msra.mxu0 0.0
    %86 = vmatprep.subr.mxu0 0.0
    %87 = vmatpush1.msra.mxu0 0.0
    %88 = vmatprep.subr.mxu0 0.0
    %89 = vmatpush1.msra.mxu0 0.0
    %90 = vmatprep.subr.mxu0 0.0
    %91 = vmatpush1.msra.mxu0 0.0
    %92 = vmatprep.subr.mxu0 0.0
    %93 = vmatpush1.msra.mxu0 0.0
    %94 = vmatprep.subr.mxu0 0.0
    %95 = vmatpush1.msra.mxu0 0.0
    %96 = vmatprep.subr.mxu0 0.0
    %97 = vmatpush1.msra.mxu0 0.0
    %98 = vmatprep.subr.mxu0 0.0
    %99 = vmatpush1.msra.mxu0 0.0
    %100 = vmatprep.subr.mxu0 0.0
    %101 = vmatpush1.msra.mxu0 0.0
    %102 = vmatprep.subr.mxu0 0.0
    %103 = vmatpush1.msra.mxu0 0.0
    %104 = vmatprep.subr.mxu0 0.0
    %105 = vmatpush1.msra.mxu0 0.0
    %106 = vmatprep.subr.mxu0 0.0
    %107 = vmatpush1.msra.mxu0 0.0
    %108 = vmatprep.subr.mxu0 0.0
    %109 = vmatpush1.msra.mxu0 0.0
    %110 = vmatprep.subr.mxu0 0.0
    %111 = vmatpush1.msra.mxu0 0.0
    %112 = vmatprep.subr.mxu0 0.0
    %113 = vmatpush1.msra.mxu0 0.0
    %114 = vmatprep.subr.mxu0 0.0
    %115 = vmatpush1.msra.mxu0 0.0
    %116 = vmatprep.subr.mxu0 0.0
    %117 = vmatpush1.msra.mxu0 0.0
    %118 = vmatprep.subr.mxu0 0.0
    %119 = vmatpush1.msra.mxu0 0.0
    %120 = vmatprep.subr.mxu0 0.0
    %121 = vmatpush1.msra.mxu0 0.0
    %122 = vmatprep.subr.mxu0 0.0
    %123 = vmatpush1.msra.mxu0 0.0
    %124 = vmatprep.subr.mxu0 0.0
    %125 = vmatpush1.msra.mxu0 0.0
    %126 = vmatprep.mubr.f32.mxu0 0.0
    %127 = vmatmul.mubr.f32.gmra.mrb[0].mxu0 %v53
    %v128 = vpop.f32.mrb[0].mxu0
    %v129 = vadd.f32 %v49, %v128
    %v130 = vpop.f32.mrb[0].mxu0
    %131 = vmatprep.mubr.f32.mxu0 0.0
    %132 = vmatmul.mubr.f32.gmra.mrb[0].mxu0 %v56
    %v133 = vpop.f32.mrb[0].mxu0
    %v134 = vadd.f32 %v49, %v133
    %v135 = vpop.f32.mrb[0].mxu0
    %136 = vdwg.mxu0
    %v137 = vmul.f32 %v129, 0.5
    %v138 = vmul.f32 %v134, 0.5
    %v139 = vmul.f32 %v129, 0.70710677
    %v140 = vmul.f32 %v134, 0.70710677
    %v141 = verf.f32.pop %v139
    %v142 = verf.f32.pop %v140
    %v143 = vadd.f32 %v141, 1.0
    %v144 = vadd.f32 %v142, 1.0
    %v145 = vmul.f32 %v137, %v143
    %v146 = vmul.f32 %v138, %v144
    %v147 = vld [vmem:[#allocation2] sm:$0xff]
    %v148 = vld [vmem:[#allocation2 + $0x8] sm:$0xff]
    %v149 = vld [vmem:[#allocation2 + $0x10] sm:$0xff]
    %v150 = vld [vmem:[#allocation2 + $0x18] sm:$0xff]
    %v151 = vld [vmem:[#allocation2 + $0x20] sm:$0xff]
    %v152 = vld [vmem:[#allocation2 + $0x28] sm:$0xff]
    %v153 = vld [vmem:[#allocation2 + $0x30] sm:$0xff]
    %v154 = vld [vmem:[#allocation2 + $0x38] sm:$0xff]
    %v155 = vld [vmem:[#allocation2 + $0x40] sm:$0xff]
    %v156 = vld [vmem:[#allocation2 + $0x48] sm:$0xff]
    %v157 = vld [vmem:[#allocation2 + $0x50] sm:$0xff]
    %v158 = vld [vmem:[#allocation2 + $0x58] sm:$0xff]
    %v159 = vld [vmem:[#allocation2 + $0x60] sm:$0xff]
    %v160 = vld [vmem:[#allocation2 + $0x68] sm:$0xff]
    %v161 = vld [vmem:[#allocation2 + $0x70] sm:$0xff]
    %v162 = vld [vmem:[#allocation2 + $0x78] sm:$0xff]
    %v163 = vld [vmem:[%s4] sm:$0x1]
    %v165 = vlaneseq
    %v166 = vshrl.u32 %v165, 7
    %v167 = vsub.s32 0, %v166
    %v168 = vrot.slane %v163, %v167
    %170 = vmatprep.subr.mxu0 0.0
    %171 = vmatpush1.msra.mxu0 %v147
    %172 = vmatprep.subr.mxu0 0.0
    %173 = vmatpush1.msra.mxu0 %v148
    %174 = vmatprep.subr.mxu0 0.0
    %175 = vmatpush1.msra.mxu0 %v149
    %176 = vmatprep.subr.mxu0 0.0
    %177 = vmatpush1.msra.mxu0 %v150
    %178 = vmatprep.subr.mxu0 0.0
    %179 = vmatpush1.msra.mxu0 %v151
    %180 = vmatprep.subr.mxu0 0.0
    %181 = vmatpush1.msra.mxu0 %v152
    %182 = vmatprep.subr.mxu0 0.0
    %183 = vmatpush1.msra.mxu0 %v153
    %184 = vmatprep.subr.mxu0 0.0
    %185 = vmatpush1.msra.mxu0 %v154
    %186 = vmatprep.subr.mxu0 0.0
    %187 = vmatpush1.msra.mxu0 %v155
    %188 = vmatprep.subr.mxu0 0.0
    %189 = vmatpush1.msra.mxu0 %v156
    %190 = vmatprep.subr.mxu0 0.0
    %191 = vmatpush1.msra.mxu0 %v157
    %192 = vmatprep.subr.mxu0 0.0
    %193 = vmatpush1.msra.mxu0 %v158
    %194 = vmatprep.subr.mxu0 0.0
    %195 = vmatpush1.msra.mxu0 %v159
    %196 = vmatprep.subr.mxu0 0.0
    %197 = vmatpush1.msra.mxu0 %v160
    %198 = vmatprep.subr.mxu0 0.0
    %199 = vmatpush1.msra.mxu0 %v161
    %200 = vmatprep.subr.mxu0 0.0
    %201 = vmatpush1.msra.mxu0 %v162
    %202 = vmatprep.subr.mxu0 0.0
    %203 = vmatpush1.msra.mxu0 0.0
    %204 = vmatprep.subr.mxu0 0.0
    %205 = vmatpush1.msra.mxu0 0.0
    %206 = vmatprep.subr.mxu0 0.0
    %207 = vmatpush1.msra.mxu0 0.0
    %208 = vmatprep.subr.mxu0 0.0
    %209 = vmatpush1.msra.mxu0 0.0
    %210 = vmatprep.subr.mxu0 0.0
    %211 = vmatpush1.msra.mxu0 0.0
    %212 = vmatprep.subr.mxu0 0.0
    %213 = vmatpush1.msra.mxu0 0.0
    %214 = vmatprep.subr.mxu0 0.0
    %215 = vmatpush1.msra.mxu0 0.0
    %216 = vmatprep.subr.mxu0 0.0
    %217 = vmatpush1.msra.mxu0 0.0
    %218 = vmatprep.subr.mxu0 0.0
    %219 = vmatpush1.msra.mxu0 0.0
    %220 = vmatprep.subr.mxu0 0.0
    %221 = vmatpush1.msra.mxu0 0.0
    %222 = vmatprep.subr.mxu0 0.0
    %223 = vmatpush1.msra.mxu0 0.0
    %224 = vmatprep.subr.mxu0 0.0
    %225 = vmatpush1.msra.mxu0 0.0
    %226 = vmatprep.subr.mxu0 0.0
    %227 = vmatpush1.msra.mxu0 0.0
    %228 = vmatprep.subr.mxu0 0.0
    %229 = vmatpush1.msra.mxu0 0.0
    %230 = vmatprep.subr.mxu0 0.0
    %231 = vmatpush1.msra.mxu0 0.0
    %232 = vmatprep.subr.mxu0 0.0
    %233 = vmatpush1.msra.mxu0 0.0
    %234 = vmatprep.mubr.f32.mxu0 0.0
    %235 = vmatmul.mubr.f32.gmra.mrb[0].mxu0 %v145
    %v236 = vpop.f32.mrb[0].mxu0
    %v237 = vadd.f32 %v168, %v236
    %v238 = vpop.f32.mrb[0].mxu0
    %239 = vmatprep.mubr.f32.mxu0 0.0
    %240 = vmatmul.mubr.f32.gmra.mrb[0].mxu0 %v146
    %v241 = vpop.f32.mrb[0].mxu0
    %v242 = vadd.f32 %v168, %v241
    %v243 = vpop.f32.mrb[0].mxu0
    %244 = vdwg.mxu0
    %245 = vst [vmem:[#allocation5] sm:$0xff] %v237
    %246 = vst [vmem:[#allocation5 + $0x8] sm:$0xff] %v242
    // Predicated region
    $region34: #{tpu_custom_call.1} parent=1 // pred_check
      _
    $region35: #{tpu_custom_call.1} parent=1 // pred_check_branch
      %248 = sbr.rel (0) target = $region37
    $region36: #{tpu_custom_call.1} parent=1 // pred_region
      %s250 = ssub.s32 256, 256
      %251 = vsyncadd [#allocation4], %s250
      %s252 = sshll.u32 [#allocation5], 4
      %s253 = int_to_ptr.vmem [resolvable:$true] %s252
      %258 = dma.vmem_to_hbm [thread:$0]  %s253, 256, %s7, [#allocation4], 128, 128, 8
    $region37: #{tpu_custom_call.1} parent=1 // pred_fallthru
      _
    // Predicated region
    $region38: #{tpu_custom_call.1} parent=1 // pred_check
      _
    $region39: #{tpu_custom_call.1} parent=1 // pred_check_branch
      %260 = sbr.rel (0) target = $region41
    $region40: #{tpu_custom_call.1} parent=1 // pred_region
      %261 = dma.done [#allocation4], 256
    $region41: #{tpu_custom_call.1} parent=1 // pred_fallthru
      _
    %262 = vsyncpa [#allocation3], 1
    %263 = vsyncpa [#allocation4], 1

</llo_original>
